<compile_context>
chip_gen: v7x
topology: tpu7x:2x2x1
jax: 0.10.0
libtpu: 0.0.40
codegen_flags: <defaults>
</compile_context>

<pallas_src>
import functools

import jax
import jax.numpy as jnp
from jax.experimental import pallas as pl
from jax.experimental.pallas import tpu as pltpu

_LANE = 128


def _round_up(x, m):
    return ((x + m - 1) // m) * m


def _pick_tile_b():
    # 128 rows fill the v5e MXU M dimension; 256 fills v6e / v7x.
    try:
        kind = jax.devices()[0].device_kind.lower()
    except Exception:
        return 128
    return 128 if "v5" in kind else 256


# ----------------------------------------------------------------------------
# VirtualBatchNormalizationStats — faithful JAX port (glue, no kernel needed)
# ----------------------------------------------------------------------------
class VirtualBatchNormalizationStats:
    def __init__(self, shape, eps=0.01):
        self.sum = jnp.zeros(shape, dtype=jnp.float32)
        self.sum_of_squares = jnp.full(shape, eps, dtype=jnp.float32)
        self.count = eps

    def increment(self, s, ssq, count):
        self.sum = self.sum + s
        self.sum_of_squares = self.sum_of_squares + ssq
        self.count = self.count + count

    @property
    def mean(self):
        return self.sum / self.count

    @property
    def std(self):
        return jnp.sqrt(
            jnp.maximum(self.sum_of_squares / self.count - jnp.square(self.mean), 0.01)
        )

    @property
    def shape(self):
        return self.sum.shape

    def set(self, mean, std, count):
        self.sum = mean * count
        self.sum_of_squares = (jnp.square(mean) + jnp.square(std)) * count
        self.count = count


# ----------------------------------------------------------------------------
# Pallas kernel: the wrapped model's forward pass (2-layer MLP policy)
# ----------------------------------------------------------------------------
def _es_mlp_kernel(x_ref, mean_ref, inv_std_ref, w1_ref, b1_ref, w2_ref, b2_ref,
                   out_ref):
    # x_ref:   [TB, D] bf16    mean/inv_std: [1, D] f32
    # w1_ref:  [D, H]  bf16    b1_ref: [1, H] f32
    # w2_ref:  [H, Ap] bf16    b2_ref: [1, Ap] f32
    # out_ref: [TB, Ap] f32    (Ap = actions padded to a 128-lane multiple)
    #
    # VBN normalization in f32 (rides free in VPU slots; identity when
    # mean=0 / inv_std=1), then bf16 operands on the MXU with f32 accumulation.
    x = (x_ref[...].astype(jnp.float32) - mean_ref[...]) * inv_std_ref[...]
    h = jnp.dot(x.astype(jnp.bfloat16), w1_ref[...],
                preferred_element_type=jnp.float32) + b1_ref[...]
    h = jnp.tanh(h)
    y = jnp.dot(h.astype(jnp.bfloat16), w2_ref[...],
                preferred_element_type=jnp.float32) + b2_ref[...]
    out_ref[...] = y


@functools.partial(jax.jit, static_argnames=("tile_b", "n_actions"))
def _es_mlp_forward_padded(x, mean, inv_std, w1, b1, w2p, b2p, *, tile_b,
                           n_actions):
    B, D = x.shape
    H = w1.shape[1]
    Ap = w2p.shape[1]

    # Pad the population/batch dimension to a multiple of the batch tile.
    Bp = _round_up(B, tile_b)
    if Bp != B:
        x = jnp.pad(x, ((0, Bp - B), (0, 0)))

    grid = (Bp // tile_b,)
    flops = 2 * Bp * D * H + 2 * Bp * H * Ap
    bytes_accessed = (
        Bp * D * x.dtype.itemsize          # x (bf16)
        + D * H * 2 + H * Ap * 2           # bf16 weights
        + (H + Ap + 2 * D) * 4             # f32 biases + mean/inv_std
        + Bp * Ap * 4                      # f32 output
    )

    out = pl.pallas_call(
        _es_mlp_kernel,
        out_shape=jax.ShapeDtypeStruct((Bp, Ap), jnp.float32),
        grid=grid,
        in_specs=[
            pl.BlockSpec((tile_b, D), lambda b: (b, 0)),   # x: tiled over batch
            pl.BlockSpec((1, D), lambda b: (0, 0)),        # mean: VMEM-resident
            pl.BlockSpec((1, D), lambda b: (0, 0)),        # inv_std
            pl.BlockSpec((D, H), lambda b: (0, 0)),        # w1
            pl.BlockSpec((1, H), lambda b: (0, 0)),        # b1
            pl.BlockSpec((H, Ap), lambda b: (0, 0)),       # w2 (lane-padded)
            pl.BlockSpec((1, Ap), lambda b: (0, 0)),       # b2 (lane-padded)
        ],
        out_specs=pl.BlockSpec((tile_b, Ap), lambda b: (b, 0)),
        compiler_params=pltpu.CompilerParams(
            dimension_semantics=("parallel",),             # megacore on v7x
        ),
        cost_estimate=pl.CostEstimate(
            flops=flops, transcendentals=Bp * H, bytes_accessed=bytes_accessed),
    )(x, mean, inv_std, w1, b1, w2p, b2p)

    # Crop batch padding and the lane padding on the action dimension.
    return out[:B, :n_actions]


# ----------------------------------------------------------------------------
# EsModelWrapper — JAX version
# ----------------------------------------------------------------------------
class EsModelWrapperJAX:
    """Wraps a (synthetic) MLP policy model + VBN stats, like EsModelWrapper."""

    def __init__(self, params, optimizer, state_shape, tile_b=None):
        self.optimizer = optimizer  # unused by forward (as in the original)
        self.vbn_stats = VirtualBatchNormalizationStats(state_shape)
        self.tile_b = tile_b if tile_b is not None else _pick_tile_b()

        # Freeze params (requires_grad_(False) analogue); cast the matmul
        # operands to bf16 once; zero-pad the action dim to 128 lanes so the
        # kernel's output stores are dense.
        w1 = jax.lax.stop_gradient(params["w1"]).astype(jnp.float32)
        b1 = jax.lax.stop_gradient(params["b1"]).astype(jnp.float32)
        w2 = jax.lax.stop_gradient(params["w2"]).astype(jnp.float32)
        b2 = jax.lax.stop_gradient(params["b2"]).astype(jnp.float32)

        self.n_actions = w2.shape[1]
        a_pad = _round_up(self.n_actions, _LANE)
        self.w1 = w1.astype(jnp.bfloat16)
        self.b1 = b1
        self.w2p = jnp.pad(
            w2, ((0, 0), (0, a_pad - self.n_actions))).astype(jnp.bfloat16)
        self.b2p = jnp.pad(b2, ((0, 0), (0, a_pad - self.n_actions)))

        d = w1.shape[0]
        # Identity normalization by default: the original forward does NOT
        # apply vbn_stats to x.  Pass normalize=True to use the fused VBN path.
        self._zero_mean = jnp.zeros((1, d), jnp.float32)
        self._unit_inv_std = jnp.ones((1, d), jnp.float32)

    def forward(self, x, normalize=False):
        # Original: self.model.forward(*args, **kwargs) (return value dropped);
        # here the model output is returned so it can be inspected/blocked on.
        if normalize:
            mean = self.vbn_stats.mean.reshape(1, -1).astype(jnp.float32)
            inv_std = (1.0 / self.vbn_stats.std).reshape(1, -1).astype(jnp.float32)
        else:
            mean, inv_std = self._zero_mean, self._unit_inv_std
        return _es_mlp_forward_padded(
            x.astype(jnp.bfloat16), mean, inv_std,
            self.w1, self.b1, self.w2p, self.b2p,
            tile_b=self.tile_b, n_actions=self.n_actions)

    __call__ = forward


def _init_params(key, state_dim, hidden, n_actions):
    k1, k2, k3, k4 = jax.random.split(key, 4)
    scale1 = 1.0 / jnp.sqrt(state_dim)
    scale2 = 1.0 / jnp.sqrt(hidden)
    return {
        "w1": jax.random.uniform(k1, (state_dim, hidden), jnp.float32, -scale1, scale1),
        "b1": jax.random.uniform(k2, (1, hidden), jnp.float32, -scale1, scale1),
        "w2": jax.random.uniform(k3, (hidden, n_actions), jnp.float32, -scale2, scale2),
        "b2": jax.random.uniform(k4, (1, n_actions), jnp.float32, -scale2, scale2),
    }


if __name__ == "__main__":
    # One batched ES evaluation: population x states folded into a single
    # batch dimension that becomes the kernel's grid axis.
    BATCH, STATE_DIM, HIDDEN, N_ACTIONS = 256, 32, 128, 8

    key = jax.random.PRNGKey(0)
    k_x, k_p = jax.random.split(key)
    x = jax.random.normal(k_x, (BATCH, STATE_DIM), dtype=jnp.float32)
    params = _init_params(k_p, STATE_DIM, HIDDEN, N_ACTIONS)

    wrapper = EsModelWrapperJAX(params, optimizer=None, state_shape=(STATE_DIM,))

    # Exercise the VBN stats bookkeeping (glue, mirrors the numpy class).
    wrapper.vbn_stats.increment(
        jnp.sum(x, axis=0), jnp.sum(jnp.square(x), axis=0), float(BATCH)
    )
    _ = wrapper.vbn_stats.mean
    _ = wrapper.vbn_stats.std

    out = wrapper.forward(x)
    out = jax.block_until_ready(out)

    # Reference with the same bf16 operand / f32 accumulation recipe.
    xb = x.astype(jnp.bfloat16)
    h_ref = jnp.tanh(
        jnp.dot(xb, params["w1"].astype(jnp.bfloat16),
                preferred_element_type=jnp.float32) + params["b1"])
    ref = jnp.dot(h_ref.astype(jnp.bfloat16), params["w2"].astype(jnp.bfloat16),
                  preferred_element_type=jnp.float32) + params["b2"]

    assert out.shape == (BATCH, N_ACTIONS)
    assert jnp.allclose(out, ref, atol=2e-2, rtol=2e-2)

    # Also sanity-check the fused VBN-normalized path runs.
    out_norm = jax.block_until_ready(wrapper.forward(x, normalize=True))
    assert out_norm.shape == (BATCH, N_ACTIONS)

    print("KERNEL_OK")
</pallas_src>

<mosaic_0001>
module attributes {stable_mosaic.version = 11 : i64} {
  func.func @_es_mlp_kernel(%arg0: i32, %arg1: memref<256x32xbf16, #tpu.memory_space<vmem>>, %arg2: memref<1x32xf32, #tpu.memory_space<vmem>>, %arg3: memref<1x32xf32, #tpu.memory_space<vmem>>, %arg4: memref<32x128xbf16, #tpu.memory_space<vmem>>, %arg5: memref<1x128xf32, #tpu.memory_space<vmem>>, %arg6: memref<128x128xbf16, #tpu.memory_space<vmem>>, %arg7: memref<1x128xf32, #tpu.memory_space<vmem>>, %arg8: memref<256x128xf32, #tpu.memory_space<vmem>>) attributes {dimension_semantics = [#tpu.dimension_semantics<parallel>], iteration_bounds = array<i64: 1>, scalar_prefetch = 0 : i64, scratch_operands = 0 : i64, tpu.core_type = #tpu.core_type<tc>, window_params = [{transform_indices = @transform_0, window_bounds = array<i64: 256, 32>}, {pipeline_mode = #tpu.pipeline_mode<synchronous>, transform_indices = @transform_1, window_bounds = array<i64: 1, 32>}, {pipeline_mode = #tpu.pipeline_mode<synchronous>, transform_indices = @transform_2, window_bounds = array<i64: 1, 32>}, {pipeline_mode = #tpu.pipeline_mode<synchronous>, transform_indices = @transform_3, window_bounds = array<i64: 32, 128>}, {pipeline_mode = #tpu.pipeline_mode<synchronous>, transform_indices = @transform_4, window_bounds = array<i64: 1, 128>}, {pipeline_mode = #tpu.pipeline_mode<synchronous>, transform_indices = @transform_5, window_bounds = array<i64: 128, 128>}, {pipeline_mode = #tpu.pipeline_mode<synchronous>, transform_indices = @transform_6, window_bounds = array<i64: 1, 128>}, {transform_indices = @transform_7, window_bounds = array<i64: 256, 128>}]} {
    %c0 = arith.constant 0 : index
    %c0_0 = arith.constant 0 : index
    %0 = vector.load %arg1[%c0, %c0_0] : memref<256x32xbf16, #tpu.memory_space<vmem>>, vector<256x32xbf16>
    %1 = arith.extf %0 : vector<256x32xbf16> to vector<256x32xf32>
    %c0_1 = arith.constant 0 : index
    %c0_2 = arith.constant 0 : index
    %2 = vector.load %arg2[%c0_1, %c0_2] : memref<1x32xf32, #tpu.memory_space<vmem>>, vector<1x32xf32>
    %3 = vector.broadcast %2 : vector<1x32xf32> to vector<256x32xf32>
    %4 = arith.subf %1, %3 : vector<256x32xf32>
    %c0_3 = arith.constant 0 : index
    %c0_4 = arith.constant 0 : index
    %5 = vector.load %arg3[%c0_3, %c0_4] : memref<1x32xf32, #tpu.memory_space<vmem>>, vector<1x32xf32>
    %6 = vector.broadcast %5 : vector<1x32xf32> to vector<256x32xf32>
    %7 = arith.mulf %4, %6 : vector<256x32xf32>
    %8 = arith.truncf %7 : vector<256x32xf32> to vector<256x32xbf16>
    %c0_5 = arith.constant 0 : index
    %c0_6 = arith.constant 0 : index
    %9 = vector.load %arg4[%c0_5, %c0_6] : memref<32x128xbf16, #tpu.memory_space<vmem>>, vector<32x128xbf16>
    %cst = arith.constant dense<0.000000e+00> : vector<256x128xf32>
    %10 = tpu.matmul %8, %9, %cst {dimension_numbers = #tpu.dot_dimension_numbers<[1], [0], [0], [1], [0, 0, 1, 1], [], []>} : vector<256x32xbf16>, vector<32x128xbf16>, vector<256x128xf32> -> vector<256x128xf32>
    %c0_7 = arith.constant 0 : index
    %c0_8 = arith.constant 0 : index
    %11 = vector.load %arg5[%c0_7, %c0_8] : memref<1x128xf32, #tpu.memory_space<vmem>>, vector<1x128xf32>
    %12 = vector.broadcast %11 : vector<1x128xf32> to vector<256x128xf32>
    %13 = arith.addf %10, %12 : vector<256x128xf32>
    %14 = math.tanh %13 : vector<256x128xf32>
    %15 = arith.truncf %14 : vector<256x128xf32> to vector<256x128xbf16>
    %c0_9 = arith.constant 0 : index
    %c0_10 = arith.constant 0 : index
    %16 = vector.load %arg6[%c0_9, %c0_10] : memref<128x128xbf16, #tpu.memory_space<vmem>>, vector<128x128xbf16>
    %cst_11 = arith.constant dense<0.000000e+00> : vector<256x128xf32>
    %17 = tpu.matmul %15, %16, %cst_11 {dimension_numbers = #tpu.dot_dimension_numbers<[1], [0], [0], [1], [0, 0, 1, 1], [], []>} : vector<256x128xbf16>, vector<128x128xbf16>, vector<256x128xf32> -> vector<256x128xf32>
    %c0_12 = arith.constant 0 : index
    %c0_13 = arith.constant 0 : index
    %18 = vector.load %arg7[%c0_12, %c0_13] : memref<1x128xf32, #tpu.memory_space<vmem>>, vector<1x128xf32>
    %19 = vector.broadcast %18 : vector<1x128xf32> to vector<256x128xf32>
    %20 = arith.addf %17, %19 : vector<256x128xf32>
    %c0_14 = arith.constant 0 : index
    %c0_15 = arith.constant 0 : index
    %21 = vector.load %arg8[%c0_14, %c0_15] : memref<256x128xf32, #tpu.memory_space<vmem>>, vector<256x128xf32>
    tpu.vector_store %arg8[%c0_14, %c0_15], %20 {strides = array<i32>} : memref<256x128xf32, #tpu.memory_space<vmem>>, vector<256x128xf32>,
    return
  }
  func.func @transform_0(%arg0: i32) -> (i32, i32) {
    %c0_i32 = arith.constant 0 : i32
    %c0_i32_0 = arith.constant 0 : i32
    return %arg0, %c0_i32 : i32, i32
  }
  func.func @transform_1(%arg0: i32) -> (i32, i32) {
    %c0_i32 = arith.constant 0 : i32
    %c0_i32_0 = arith.constant 0 : i32
    %c0_i32_1 = arith.constant 0 : i32
    return %c0_i32, %c0_i32_0 : i32, i32
  }
  func.func @transform_2(%arg0: i32) -> (i32, i32) {
    %c0_i32 = arith.constant 0 : i32
    %c0_i32_0 = arith.constant 0 : i32
    %c0_i32_1 = arith.constant 0 : i32
    return %c0_i32, %c0_i32_0 : i32, i32
  }
  func.func @transform_3(%arg0: i32) -> (i32, i32) {
    %c0_i32 = arith.constant 0 : i32
    %c0_i32_0 = arith.constant 0 : i32
    %c0_i32_1 = arith.constant 0 : i32
    return %c0_i32, %c0_i32_0 : i32, i32
  }
  func.func @transform_4(%arg0: i32) -> (i32, i32) {
    %c0_i32 = arith.constant 0 : i32
    %c0_i32_0 = arith.constant 0 : i32
    %c0_i32_1 = arith.constant 0 : i32
    return %c0_i32, %c0_i32_0 : i32, i32
  }
  func.func @transform_5(%arg0: i32) -> (i32, i32) {
    %c0_i32 = arith.constant 0 : i32
    %c0_i32_0 = arith.constant 0 : i32
    %c0_i32_1 = arith.constant 0 : i32
    return %c0_i32, %c0_i32_0 : i32, i32
  }
  func.func @transform_6(%arg0: i32) -> (i32, i32) {
    %c0_i32 = arith.constant 0 : i32
    %c0_i32_0 = arith.constant 0 : i32
    %c0_i32_1 = arith.constant 0 : i32
    return %c0_i32, %c0_i32_0 : i32, i32
  }
  func.func @transform_7(%arg0: i32) -> (i32, i32) {
    %c0_i32 = arith.constant 0 : i32
    %c0_i32_0 = arith.constant 0 : i32
    return %arg0, %c0_i32 : i32, i32
  }
}

</mosaic_0001>

<llo_original>
// kernel: _es_mlp_forward_padded.1
$region0: #{_es_mlp_forward_padded.1}
  #allocation0 [shape = 'u32[]', space=smem, size = 0x4, offset = 0x4, fixed_abs, tag = 'smem constant byte address 0x4 - core index']
  #allocation1 [shape = 'u32[144,128]{1,0:T(1,128)}', space=vmem, size = 0x12000, scoped, tag = 'internal scratch']
  %s0 = inlined_call_operand.vmem [shape: bf16[256,32], index: 0, kind: input, shape index: {}]
  %s1 = inlined_call_operand.vmem [shape: f32[1,32], index: 1, kind: input, shape index: {}]
  %s2 = inlined_call_operand.vmem [shape: f32[1,32], index: 2, kind: input, shape index: {}]
  %s3 = inlined_call_operand.vmem [shape: bf16[32,128], index: 3, kind: input, shape index: {}]
  %s4 = inlined_call_operand.vmem [shape: f32[1,128], index: 4, kind: input, shape index: {}]
  %s5 = inlined_call_operand.vmem [shape: bf16[128,128], index: 5, kind: input, shape index: {}]
  %s6 = inlined_call_operand.vmem [shape: f32[1,128], index: 6, kind: input, shape index: {}]
  %s7 = inlined_call_operand.vmem [shape: f32[256,128], index: 7, kind: output, shape index: {}]
  %s8 = sld [smem:[#allocation0]]
  $region38: #{_es_mlp_forward_padded.1} parent=0
    _
  %s10 = ssub.s32 1, %s8
  %s11 = scalar_select 0, %s10, %s8
  // Predicated region
  $region2: #{_es_mlp_forward_padded.1} parent=0 // pred_check
    _
  $region3: #{_es_mlp_forward_padded.1} parent=0 // pred_check_branch
    %13 = sbr.rel (0) target = $region5
  $region4: #{_es_mlp_forward_padded.1} parent=0 // pred_region
    _
  $region5: #{_es_mlp_forward_padded.1} parent=0 // pred_fallthru
    _
  // Predicated region
  $region6: #{_es_mlp_forward_padded.1} parent=0 // pred_check
    _
  $region7: #{_es_mlp_forward_padded.1} parent=0 // pred_check_branch
    %15 = sbr.rel (0) target = $region9
  $region8: #{_es_mlp_forward_padded.1} parent=0 // pred_region
    _
  $region9: #{_es_mlp_forward_padded.1} parent=0 // pred_fallthru
    _
  // Predicated region
  $region10: #{_es_mlp_forward_padded.1} parent=0 // pred_check
    _
  $region11: #{_es_mlp_forward_padded.1} parent=0 // pred_check_branch
    %17 = sbr.rel (0) target = $region13
  $region12: #{_es_mlp_forward_padded.1} parent=0 // pred_region
    _
  $region13: #{_es_mlp_forward_padded.1} parent=0 // pred_fallthru
    _
  // Predicated region
  $region14: #{_es_mlp_forward_padded.1} parent=0 // pred_check
    _
  $region15: #{_es_mlp_forward_padded.1} parent=0 // pred_check_branch
    %19 = sbr.rel (0) target = $region17
  $region16: #{_es_mlp_forward_padded.1} parent=0 // pred_region
    _
  $region17: #{_es_mlp_forward_padded.1} parent=0 // pred_fallthru
    _
  // Predicated region
  $region18: #{_es_mlp_forward_padded.1} parent=0 // pred_check
    _
  $region19: #{_es_mlp_forward_padded.1} parent=0 // pred_check_branch
    %21 = sbr.rel (0) target = $region21
  $region20: #{_es_mlp_forward_padded.1} parent=0 // pred_region
    _
  $region21: #{_es_mlp_forward_padded.1} parent=0 // pred_fallthru
    _
  // Predicated region
  $region22: #{_es_mlp_forward_padded.1} parent=0 // pred_check
    _
  $region23: #{_es_mlp_forward_padded.1} parent=0 // pred_check_branch
    %23 = sbr.rel (0) target = $region25
  $region24: #{_es_mlp_forward_padded.1} parent=0 // pred_region
    _
  $region25: #{_es_mlp_forward_padded.1} parent=0 // pred_fallthru
    _
  // Predicated region
  $region26: #{_es_mlp_forward_padded.1} parent=0 // pred_check
    _
  $region27: #{_es_mlp_forward_padded.1} parent=0 // pred_check_branch
    %25 = sbr.rel (0) target = $region29
  $region28: #{_es_mlp_forward_padded.1} parent=0 // pred_region
    _
  $region29: #{_es_mlp_forward_padded.1} parent=0 // pred_fallthru
    _
  %v27 = vld [vmem:[%s0] sm:$0xf]
  %v28 = vld [vmem:[%s0 + $0x4] sm:$0xf]
  %v29 = vld [vmem:[%s0 + $0x8] sm:$0xf]
  %v30 = vld [vmem:[%s0 + $0xc] sm:$0xf]
  %v31 = vld [vmem:[%s0 + $0x10] sm:$0xf]
  %v32 = vld [vmem:[%s0 + $0x14] sm:$0xf]
  %v33 = vld [vmem:[%s0 + $0x18] sm:$0xf]
  %v34 = vld [vmem:[%s0 + $0x1c] sm:$0xf]
  %v35 = vld [vmem:[%s0 + $0x20] sm:$0xf]
  %v36 = vld [vmem:[%s0 + $0x24] sm:$0xf]
  %v37 = vld [vmem:[%s0 + $0x28] sm:$0xf]
  %v38 = vld [vmem:[%s0 + $0x2c] sm:$0xf]
  %v39 = vld [vmem:[%s0 + $0x30] sm:$0xf]
  %v40 = vld [vmem:[%s0 + $0x34] sm:$0xf]
  %v41 = vld [vmem:[%s0 + $0x38] sm:$0xf]
  %v42 = vld [vmem:[%s0 + $0x3c] sm:$0xf]
  %v43 = vld [vmem:[%s0 + $0x40] sm:$0xf]
  %v44 = vld [vmem:[%s0 + $0x44] sm:$0xf]
  %v45 = vld [vmem:[%s0 + $0x48] sm:$0xf]
  %v46 = vld [vmem:[%s0 + $0x4c] sm:$0xf]
  %v47 = vld [vmem:[%s0 + $0x50] sm:$0xf]
  %v48 = vld [vmem:[%s0 + $0x54] sm:$0xf]
  %v49 = vld [vmem:[%s0 + $0x58] sm:$0xf]
  %v50 = vld [vmem:[%s0 + $0x5c] sm:$0xf]
  %v51 = vld [vmem:[%s0 + $0x60] sm:$0xf]
  %v52 = vld [vmem:[%s0 + $0x64] sm:$0xf]
  %v53 = vld [vmem:[%s0 + $0x68] sm:$0xf]
  %v54 = vld [vmem:[%s0 + $0x6c] sm:$0xf]
  %v55 = vld [vmem:[%s0 + $0x70] sm:$0xf]
  %v56 = vld [vmem:[%s0 + $0x74] sm:$0xf]
  %v57 = vld [vmem:[%s0 + $0x78] sm:$0xf]
  %v58 = vld [vmem:[%s0 + $0x7c] sm:$0xf]
  %v59 = vunpack.c.l.bf16 %v27
  %v60 = vunpack.c.l.bf16 %v28
  %v61 = vunpack.c.l.bf16 %v29
  %v62 = vunpack.c.l.bf16 %v30
  %v63 = vunpack.c.l.bf16 %v31
  %v64 = vunpack.c.l.bf16 %v32
  %v65 = vunpack.c.l.bf16 %v33
  %v66 = vunpack.c.l.bf16 %v34
  %v67 = vunpack.c.l.bf16 %v35
  %v68 = vunpack.c.l.bf16 %v36
  %v69 = vunpack.c.l.bf16 %v37
  %v70 = vunpack.c.l.bf16 %v38
  %v71 = vunpack.c.l.bf16 %v39
  %v72 = vunpack.c.l.bf16 %v40
  %v73 = vunpack.c.l.bf16 %v41
  %v74 = vunpack.c.l.bf16 %v42
  %v75 = vunpack.c.l.bf16 %v43
  %v76 = vunpack.c.l.bf16 %v44
  %v77 = vunpack.c.l.bf16 %v45
  %v78 = vunpack.c.l.bf16 %v46
  %v79 = vunpack.c.l.bf16 %v47
  %v80 = vunpack.c.l.bf16 %v48
  %v81 = vunpack.c.l.bf16 %v49
  %v82 = vunpack.c.l.bf16 %v50
  %v83 = vunpack.c.l.bf16 %v51
  %v84 = vunpack.c.l.bf16 %v52
  %v85 = vunpack.c.l.bf16 %v53
  %v86 = vunpack.c.l.bf16 %v54
  %v87 = vunpack.c.l.bf16 %v55
  %v88 = vunpack.c.l.bf16 %v56
  %v89 = vunpack.c.l.bf16 %v57
  %v90 = vunpack.c.l.bf16 %v58
  %v91 = vld [vmem:[%s1] sm:$0x1]
  %v93 = vlaneseq
  %v94 = vshrl.u32 %v93, 7
  %v95 = vsub.s32 0, %v94
  %v96 = vrot.slane %v91, %v95
  %v98 = vsub.f32 %v59, %v96
  %v99 = vsub.f32 %v60, %v96
  %v100 = vsub.f32 %v61, %v96
  %v101 = vsub.f32 %v62, %v96
  %v102 = vsub.f32 %v63, %v96
  %v103 = vsub.f32 %v64, %v96
  %v104 = vsub.f32 %v65, %v96
  %v105 = vsub.f32 %v66, %v96
  %v106 = vsub.f32 %v67, %v96
  %v107 = vsub.f32 %v68, %v96
  %v108 = vsub.f32 %v69, %v96
  %v109 = vsub.f32 %v70, %v96
  %v110 = vsub.f32 %v71, %v96
  %v111 = vsub.f32 %v72, %v96
  %v112 = vsub.f32 %v73, %v96
  %v113 = vsub.f32 %v74, %v96
  %v114 = vsub.f32 %v75, %v96
  %v115 = vsub.f32 %v76, %v96
  %v116 = vsub.f32 %v77, %v96
  %v117 = vsub.f32 %v78, %v96
  %v118 = vsub.f32 %v79, %v96
  %v119 = vsub.f32 %v80, %v96
  %v120 = vsub.f32 %v81, %v96
  %v121 = vsub.f32 %v82, %v96
  %v122 = vsub.f32 %v83, %v96
  %v123 = vsub.f32 %v84, %v96
  %v124 = vsub.f32 %v85, %v96
  %v125 = vsub.f32 %v86, %v96
  %v126 = vsub.f32 %v87, %v96
  %v127 = vsub.f32 %v88, %v96
  %v128 = vsub.f32 %v89, %v96
  %v129 = vsub.f32 %v90, %v96
  %v130 = vld [vmem:[%s2] sm:$0x1]
  %v132 = vlaneseq
  %v133 = vshrl.u32 %v132, 7
  %v134 = vsub.s32 0, %v133
  %v135 = vrot.slane %v130, %v134
  %v137 = vmul.f32 %v98, %v135
  %v138 = vmul.f32 %v99, %v135
  %v139 = vmul.f32 %v100, %v135
  %v140 = vmul.f32 %v101, %v135
  %v141 = vmul.f32 %v102, %v135
  %v142 = vmul.f32 %v103, %v135
  %v143 = vmul.f32 %v104, %v135
  %v144 = vmul.f32 %v105, %v135
  %v145 = vmul.f32 %v106, %v135
  %v146 = vmul.f32 %v107, %v135
  %v147 = vmul.f32 %v108, %v135
  %v148 = vmul.f32 %v109, %v135
  %v149 = vmul.f32 %v110, %v135
  %v150 = vmul.f32 %v111, %v135
  %v151 = vmul.f32 %v112, %v135
  %v152 = vmul.f32 %v113, %v135
  %v153 = vmul.f32 %v114, %v135
  %v154 = vmul.f32 %v115, %v135
  %v155 = vmul.f32 %v116, %v135
  %v156 = vmul.f32 %v117, %v135
  %v157 = vmul.f32 %v118, %v135
  %v158 = vmul.f32 %v119, %v135
  %v159 = vmul.f32 %v120, %v135
  %v160 = vmul.f32 %v121, %v135
  %v161 = vmul.f32 %v122, %v135
  %v162 = vmul.f32 %v123, %v135
  %v163 = vmul.f32 %v124, %v135
  %v164 = vmul.f32 %v125, %v135
  %v165 = vmul.f32 %v126, %v135
  %v166 = vmul.f32 %v127, %v135
  %v167 = vmul.f32 %v128, %v135
  %v168 = vmul.f32 %v129, %v135
  %v169 = vpack.c.bf16 %v138, %v137
  %v170 = vpack.c.bf16 %v140, %v139
  %v171 = vpack.c.bf16 %v142, %v141
  %v172 = vpack.c.bf16 %v144, %v143
  %v173 = vpack.c.bf16 %v146, %v145
  %v174 = vpack.c.bf16 %v148, %v147
  %v175 = vpack.c.bf16 %v150, %v149
  %v176 = vpack.c.bf16 %v152, %v151
  %v177 = vpack.c.bf16 %v154, %v153
  %v178 = vpack.c.bf16 %v156, %v155
  %v179 = vpack.c.bf16 %v158, %v157
  %v180 = vpack.c.bf16 %v160, %v159
  %v181 = vpack.c.bf16 %v162, %v161
  %v182 = vpack.c.bf16 %v164, %v163
  %v183 = vpack.c.bf16 %v166, %v165
  %v184 = vpack.c.bf16 %v168, %v167
  %v185 = vld [vmem:[%s3] sm:$0xf]
  %v186 = vld [vmem:[%s3 + $0x4] sm:$0xf]
  %v187 = vld [vmem:[%s3 + $0x8] sm:$0xf]
  %v188 = vld [vmem:[%s3 + $0xc] sm:$0xf]
  %v189 = vld [vmem:[%s4] sm:$0x1]
  %v191 = vlaneseq
  %v192 = vshrl.u32 %v191, 7
  %v193 = vsub.s32 0, %v192
  %v194 = vrot.slane %v189, %v193
  %v200 = vunpack.c.l.b16 %v185
  %v201 = vunpack.c.l.b16 %v186
  %v202 = vunpack.c.l.b16 %v187
  %v203 = vunpack.c.l.b16 %v188
  %v204 = vpack.c.b16 %v201, %v200
  %v205 = vpack.c.b16 %v203, %v202
  %vm208 = vcmask 261120
  %v210 = vsel %vm208, %v169, 0
  %v213 = vsel %vm208, %v170, 0
  %v216 = vsel %vm208, %v171, 0
  %v219 = vsel %vm208, %v172, 0
  %v222 = vsel %vm208, %v173, 0
  %v225 = vsel %vm208, %v174, 0
  %v228 = vsel %vm208, %v175, 0
  %v231 = vsel %vm208, %v176, 0
  %v234 = vsel %vm208, %v177, 0
  %v237 = vsel %vm208, %v178, 0
  %v240 = vsel %vm208, %v179, 0
  %v243 = vsel %vm208, %v180, 0
  %v246 = vsel %vm208, %v181, 0
  %v249 = vsel %vm208, %v182, 0
  %v252 = vsel %vm208, %v183, 0
  %v255 = vsel %vm208, %v184, 0
  %257 = vmatprep.subr.bf16.mxu0 0
  %258 = vmatpush1.bf16.msra.mxu0 %v204
  %259 = vmatprep.subr.bf16.mxu0 0
  %260 = vmatpush1.bf16.msra.mxu0 %v205
  %261 = vmatprep.subr.bf16.mxu0 0
  %262 = vmatpush1.bf16.msra.mxu0 0
  %263 = vmatprep.subr.bf16.mxu0 0
  %264 = vmatpush1.bf16.msra.mxu0 0
  %265 = vmatprep.subr.bf16.mxu0 0
  %266 = vmatpush1.bf16.msra.mxu0 0
  %267 = vmatprep.subr.bf16.mxu0 0
  %268 = vmatpush1.bf16.msra.mxu0 0
  %269 = vmatprep.subr.bf16.mxu0 0
  %270 = vmatpush1.bf16.msra.mxu0 0
  %271 = vmatprep.subr.bf16.mxu0 0
  %272 = vmatpush1.bf16.msra.mxu0 0
  %273 = vmatprep.subr.bf16.mxu0 0
  %274 = vmatpush1.bf16.msra.mxu0 0
  %275 = vmatprep.subr.bf16.mxu0 0
  %276 = vmatpush1.bf16.msra.mxu0 0
  %277 = vmatprep.subr.bf16.mxu0 0
  %278 = vmatpush1.bf16.msra.mxu0 0
  %279 = vmatprep.subr.bf16.mxu0 0
  %280 = vmatpush1.bf16.msra.mxu0 0
  %281 = vmatprep.subr.bf16.mxu0 0
  %282 = vmatpush1.bf16.msra.mxu0 0
  %283 = vmatprep.subr.bf16.mxu0 0
  %284 = vmatpush1.bf16.msra.mxu0 0
  %285 = vmatprep.subr.bf16.mxu0 0
  %286 = vmatpush1.bf16.msra.mxu0 0
  %287 = vmatprep.subr.bf16.mxu0 0
  %288 = vmatpush1.bf16.msra.mxu0 0
  %289 = vmatprep.mubr.bf16.mxu0 0
  %290 = vmatmul.mubr.bf16.gmra.mrb[0].mxu0 %v210
  %v291 = vpop.f32.mrb[0].mxu0
  %v292 = vadd.f32 %v194, %v291
  %v293 = vpop.f32.mrb[0].mxu0
  %v294 = vpop.f32.mrb[0].mxu0
  %v295 = vadd.f32 %v194, %v294
  %v296 = vpop.f32.mrb[0].mxu0
  %297 = vmatprep.mubr.bf16.mxu0 0
  %298 = vmatmul.mubr.bf16.gmra.mrb[0].mxu0 %v213
  %v299 = vpop.f32.mrb[0].mxu0
  %v300 = vadd.f32 %v194, %v299
  %v301 = vpop.f32.mrb[0].mxu0
  %v302 = vpop.f32.mrb[0].mxu0
  %v303 = vadd.f32 %v194, %v302
  %v304 = vpop.f32.mrb[0].mxu0
  %305 = vmatprep.mubr.bf16.mxu0 0
  %306 = vmatmul.mubr.bf16.gmra.mrb[0].mxu0 %v216
  %v307 = vpop.f32.mrb[0].mxu0
  %v308 = vadd.f32 %v194, %v307
  %v309 = vpop.f32.mrb[0].mxu0
  %v310 = vpop.f32.mrb[0].mxu0
  %v311 = vadd.f32 %v194, %v310
  %v312 = vpop.f32.mrb[0].mxu0
  %313 = vmatprep.mubr.bf16.mxu0 0
  %314 = vmatmul.mubr.bf16.gmra.mrb[0].mxu0 %v219
  %v315 = vpop.f32.mrb[0].mxu0
  %v316 = vadd.f32 %v194, %v315
  %v317 = vpop.f32.mrb[0].mxu0
  %v318 = vpop.f32.mrb[0].mxu0
  %v319 = vadd.f32 %v194, %v318
  %v320 = vpop.f32.mrb[0].mxu0
  %321 = vmatprep.mubr.bf16.mxu0 0
  %322 = vmatmul.mubr.bf16.gmra.mrb[0].mxu0 %v222
  %v323 = vpop.f32.mrb[0].mxu0
  %v324 = vadd.f32 %v194, %v323
  %v325 = vpop.f32.mrb[0].mxu0
  %v326 = vpop.f32.mrb[0].mxu0
  %v327 = vadd.f32 %v194, %v326
  %v328 = vpop.f32.mrb[0].mxu0
  %329 = vmatprep.mubr.bf16.mxu0 0
  %330 = vmatmul.mubr.bf16.gmra.mrb[0].mxu0 %v225
  %v331 = vpop.f32.mrb[0].mxu0
  %v332 = vadd.f32 %v194, %v331
  %v333 = vpop.f32.mrb[0].mxu0
  %v334 = vpop.f32.mrb[0].mxu0
  %v335 = vadd.f32 %v194, %v334
  %v336 = vpop.f32.mrb[0].mxu0
  %337 = vmatprep.mubr.bf16.mxu0 0
  %338 = vmatmul.mubr.bf16.gmra.mrb[0].mxu0 %v228
  %v339 = vpop.f32.mrb[0].mxu0
  %v340 = vadd.f32 %v194, %v339
  %v341 = vpop.f32.mrb[0].mxu0
  %v342 = vpop.f32.mrb[0].mxu0
  %v343 = vadd.f32 %v194, %v342
  %v344 = vpop.f32.mrb[0].mxu0
  %345 = vmatprep.mubr.bf16.mxu0 0
  %346 = vmatmul.mubr.bf16.gmra.mrb[0].mxu0 %v231
  %v347 = vpop.f32.mrb[0].mxu0
  %v348 = vadd.f32 %v194, %v347
  %v349 = vpop.f32.mrb[0].mxu0
  %v350 = vpop.f32.mrb[0].mxu0
  %v351 = vadd.f32 %v194, %v350
  %v352 = vpop.f32.mrb[0].mxu0
  %353 = vmatprep.mubr.bf16.mxu0 0
  %354 = vmatmul.mubr.bf16.gmra.mrb[0].mxu0 %v234
  %v355 = vpop.f32.mrb[0].mxu0
  %v356 = vadd.f32 %v194, %v355
  %v357 = vpop.f32.mrb[0].mxu0
  %v358 = vpop.f32.mrb[0].mxu0
  %v359 = vadd.f32 %v194, %v358
  %v360 = vpop.f32.mrb[0].mxu0
  %361 = vmatprep.mubr.bf16.mxu0 0
  %362 = vmatmul.mubr.bf16.gmra.mrb[0].mxu0 %v237
  %v363 = vpop.f32.mrb[0].mxu0
  %v364 = vadd.f32 %v194, %v363
  %v365 = vpop.f32.mrb[0].mxu0
  %v366 = vpop.f32.mrb[0].mxu0
  %v367 = vadd.f32 %v194, %v366
  %v368 = vpop.f32.mrb[0].mxu0
  %369 = vmatprep.mubr.bf16.mxu0 0
  %370 = vmatmul.mubr.bf16.gmra.mrb[0].mxu0 %v240
  %v371 = vpop.f32.mrb[0].mxu0
  %v372 = vadd.f32 %v194, %v371
  %v373 = vpop.f32.mrb[0].mxu0
  %v374 = vpop.f32.mrb[0].mxu0
  %v375 = vadd.f32 %v194, %v374
  %v376 = vpop.f32.mrb[0].mxu0
  %377 = vmatprep.mubr.bf16.mxu0 0
  %378 = vmatmul.mubr.bf16.gmra.mrb[0].mxu0 %v243
  %v379 = vpop.f32.mrb[0].mxu0
  %v380 = vadd.f32 %v194, %v379
  %v381 = vpop.f32.mrb[0].mxu0
  %v382 = vpop.f32.mrb[0].mxu0
  %v383 = vadd.f32 %v194, %v382
  %v384 = vpop.f32.mrb[0].mxu0
  %385 = vmatprep.mubr.bf16.mxu0 0
  %386 = vmatmul.mubr.bf16.gmra.mrb[0].mxu0 %v246
  %v387 = vpop.f32.mrb[0].mxu0
  %v388 = vadd.f32 %v194, %v387
  %v389 = vpop.f32.mrb[0].mxu0
  %v390 = vpop.f32.mrb[0].mxu0
  %v391 = vadd.f32 %v194, %v390
  %v392 = vpop.f32.mrb[0].mxu0
  %393 = vmatprep.mubr.bf16.mxu0 0
  %394 = vmatmul.mubr.bf16.gmra.mrb[0].mxu0 %v249
  %v395 = vpop.f32.mrb[0].mxu0
  %v396 = vadd.f32 %v194, %v395
  %v397 = vpop.f32.mrb[0].mxu0
  %v398 = vpop.f32.mrb[0].mxu0
  %v399 = vadd.f32 %v194, %v398
  %v400 = vpop.f32.mrb[0].mxu0
  %401 = vmatprep.mubr.bf16.mxu0 0
  %402 = vmatmul.mubr.bf16.gmra.mrb[0].mxu0 %v252
  %v403 = vpop.f32.mrb[0].mxu0
  %v404 = vadd.f32 %v194, %v403
  %v405 = vpop.f32.mrb[0].mxu0
  %v406 = vpop.f32.mrb[0].mxu0
  %v407 = vadd.f32 %v194, %v406
  %v408 = vpop.f32.mrb[0].mxu0
  %409 = vmatprep.mubr.bf16.mxu0 0
  %410 = vmatmul.mubr.bf16.gmra.mrb[0].mxu0 %v255
  %v411 = vpop.f32.mrb[0].mxu0
  %v412 = vadd.f32 %v194, %v411
  %v413 = vpop.f32.mrb[0].mxu0
  %v414 = vpop.f32.mrb[0].mxu0
  %v415 = vadd.f32 %v194, %v414
  %v416 = vpop.f32.mrb[0].mxu0
  %417 = vdwg.mxu0
  %v418 = vtanh.pop %v292
  %v419 = vtanh.pop %v295
  %v420 = vtanh.pop %v300
  %v421 = vtanh.pop %v303
  %v422 = vtanh.pop %v308
  %v423 = vtanh.pop %v311
  %v424 = vtanh.pop %v316
  %v425 = vtanh.pop %v319
  %v426 = vtanh.pop %v324
  %v427 = vtanh.pop %v327
  %v428 = vtanh.pop %v332
  %v429 = vtanh.pop %v335
  %v430 = vtanh.pop %v340
  %v431 = vtanh.pop %v343
  %v432 = vtanh.pop %v348
  %v433 = vtanh.pop %v351
  %v434 = vtanh.pop %v356
  %v435 = vtanh.pop %v359
  %v436 = vtanh.pop %v364
  %v437 = vtanh.pop %v367
  %v438 = vtanh.pop %v372
  %v439 = vtanh.pop %v375
  %v440 = vtanh.pop %v380
  %v441 = vtanh.pop %v383
  %v442 = vtanh.pop %v388
  %v443 = vtanh.pop %v391
  %v444 = vtanh.pop %v396
  %v445 = vtanh.pop %v399
  %v446 = vtanh.pop %v404
  %v447 = vtanh.pop %v407
  %v448 = vtanh.pop %v412
  %v449 = vtanh.pop %v415
  %v450 = vpack.c.bf16 %v419, %v418
  %v451 = vpack.c.bf16 %v421, %v420
  %v452 = vpack.c.bf16 %v423, %v422
  %v453 = vpack.c.bf16 %v425, %v424
  %v454 = vpack.c.bf16 %v427, %v426
  %v455 = vpack.c.bf16 %v429, %v428
  %v456 = vpack.c.bf16 %v431, %v430
  %v457 = vpack.c.bf16 %v433, %v432
  %v458 = vpack.c.bf16 %v435, %v434
  %v459 = vpack.c.bf16 %v437, %v436
  %v460 = vpack.c.bf16 %v439, %v438
  %v461 = vpack.c.bf16 %v441, %v440
  %v462 = vpack.c.bf16 %v443, %v442
  %v463 = vpack.c.bf16 %v445, %v444
  %v464 = vpack.c.bf16 %v447, %v446
  %v465 = vpack.c.bf16 %v449, %v448
  %v466 = vld [vmem:[%s5] sm:$0xf]
  %v467 = vld [vmem:[%s5 + $0x4] sm:$0xf]
  %v468 = vld [vmem:[%s5 + $0x8] sm:$0xf]
  %v469 = vld [vmem:[%s5 + $0xc] sm:$0xf]
  %v470 = vld [vmem:[%s5 + $0x10] sm:$0xf]
  %v471 = vld [vmem:[%s5 + $0x14] sm:$0xf]
  %v472 = vld [vmem:[%s5 + $0x18] sm:$0xf]
  %v473 = vld [vmem:[%s5 + $0x1c] sm:$0xf]
  %v474 = vld [vmem:[%s5 + $0x20] sm:$0xf]
  %v475 = vld [vmem:[%s5 + $0x24] sm:$0xf]
  %v476 = vld [vmem:[%s5 + $0x28] sm:$0xf]
  %v477 = vld [vmem:[%s5 + $0x2c] sm:$0xf]
  %v478 = vld [vmem:[%s5 + $0x30] sm:$0xf]
  %v479 = vld [vmem:[%s5 + $0x34] sm:$0xf]
  %v480 = vld [vmem:[%s5 + $0x38] sm:$0xf]
  %v481 = vld [vmem:[%s5 + $0x3c] sm:$0xf]
  %v482 = vld [vmem:[%s6] sm:$0x1]
  %v484 = vlaneseq
  %v485 = vshrl.u32 %v484, 7
  %v486 = vsub.s32 0, %v485
  %v487 = vrot.slane %v482, %v486
  %v505 = vunpack.c.l.b16 %v466
  %v506 = vunpack.c.l.b16 %v467
  %v507 = vunpack.c.l.b16 %v468
  %v508 = vunpack.c.l.b16 %v469
  %v509 = vunpack.c.l.b16 %v470
  %v510 = vunpack.c.l.b16 %v471
  %v511 = vunpack.c.l.b16 %v472
  %v512 = vunpack.c.l.b16 %v473
  %v513 = vunpack.c.l.b16 %v474
  %v514 = vunpack.c.l.b16 %v475
  %v515 = vunpack.c.l.b16 %v476
  %v516 = vunpack.c.l.b16 %v477
  %v517 = vunpack.c.l.b16 %v478
  %v518 = vunpack.c.l.b16 %v479
  %v519 = vunpack.c.l.b16 %v480
  %v520 = vunpack.c.l.b16 %v481
  %v521 = vpack.c.b16 %v506, %v505
  %v522 = vpack.c.b16 %v508, %v507
  %v523 = vpack.c.b16 %v510, %v509
  %v524 = vpack.c.b16 %v512, %v511
  %v525 = vpack.c.b16 %v514, %v513
  %v526 = vpack.c.b16 %v516, %v515
  %v527 = vpack.c.b16 %v518, %v517
  %v528 = vpack.c.b16 %v520, %v519
  %537 = vmatprep.subr.bf16.mxu0 0
  %538 = vmatpush1.bf16.msra.mxu0 %v521
  %539 = vmatprep.subr.bf16.mxu0 0
  %540 = vmatpush1.bf16.msra.mxu0 %v522
  %541 = vmatprep.subr.bf16.mxu0 0
  %542 = vmatpush1.bf16.msra.mxu0 %v523
  %543 = vmatprep.subr.bf16.mxu0 0
  %544 = vmatpush1.bf16.msra.mxu0 %v524
  %545 = vmatprep.subr.bf16.mxu0 0
  %546 = vmatpush1.bf16.msra.mxu0 %v525
  %547 = vmatprep.subr.bf16.mxu0 0
  %548 = vmatpush1.bf16.msra.mxu0 %v526
  %549 = vmatprep.subr.bf16.mxu0 0
  %550 = vmatpush1.bf16.msra.mxu0 %v527
  %551 = vmatprep.subr.bf16.mxu0 0
  %552 = vmatpush1.bf16.msra.mxu0 %v528
  %553 = vmatprep.subr.bf16.mxu0 0
  %554 = vmatpush1.bf16.msra.mxu0 0
  %555 = vmatprep.subr.bf16.mxu0 0
  %556 = vmatpush1.bf16.msra.mxu0 0
  %557 = vmatprep.subr.bf16.mxu0 0
  %558 = vmatpush1.bf16.msra.mxu0 0
  %559 = vmatprep.subr.bf16.mxu0 0
  %560 = vmatpush1.bf16.msra.mxu0 0
  %561 = vmatprep.subr.bf16.mxu0 0
  %562 = vmatpush1.bf16.msra.mxu0 0
  %563 = vmatprep.subr.bf16.mxu0 0
  %564 = vmatpush1.bf16.msra.mxu0 0
  %565 = vmatprep.subr.bf16.mxu0 0
  %566 = vmatpush1.bf16.msra.mxu0 0
  %567 = vmatprep.subr.bf16.mxu0 0
  %568 = vmatpush1.bf16.msra.mxu0 0
  %569 = vmatprep.mubr.bf16.mxu0 0
  %570 = vmatmul.mubr.bf16.gmra.mrb[0].mxu0 %v450
  %v571 = vpop.f32.mrb[0].mxu0
  %v572 = vadd.f32 %v487, %v571
  %v573 = vpop.f32.mrb[0].mxu0
  %v574 = vpop.f32.mrb[0].mxu0
  %v575 = vadd.f32 %v487, %v574
  %v576 = vpop.f32.mrb[0].mxu0
  %577 = vmatprep.mubr.bf16.mxu0 0
  %578 = vmatmul.mubr.bf16.gmra.mrb[0].mxu0 %v451
  %v579 = vpop.f32.mrb[0].mxu0
  %v580 = vadd.f32 %v487, %v579
  %v581 = vpop.f32.mrb[0].mxu0
  %v582 = vpop.f32.mrb[0].mxu0
  %v583 = vadd.f32 %v487, %v582
  %v584 = vpop.f32.mrb[0].mxu0
  %585 = vmatprep.mubr.bf16.mxu0 0
  %586 = vmatmul.mubr.bf16.gmra.mrb[0].mxu0 %v452
  %v587 = vpop.f32.mrb[0].mxu0
  %v588 = vadd.f32 %v487, %v587
  %v589 = vpop.f32.mrb[0].mxu0
  %v590 = vpop.f32.mrb[0].mxu0
  %v591 = vadd.f32 %v487, %v590
  %v592 = vpop.f32.mrb[0].mxu0
  %593 = vmatprep.mubr.bf16.mxu0 0
  %594 = vmatmul.mubr.bf16.gmra.mrb[0].mxu0 %v453
  %v595 = vpop.f32.mrb[0].mxu0
  %v596 = vadd.f32 %v487, %v595
  %v597 = vpop.f32.mrb[0].mxu0
  %v598 = vpop.f32.mrb[0].mxu0
  %v599 = vadd.f32 %v487, %v598
  %v600 = vpop.f32.mrb[0].mxu0
  %601 = vmatprep.mubr.bf16.mxu0 0
  %602 = vmatmul.mubr.bf16.gmra.mrb[0].mxu0 %v454
  %v603 = vpop.f32.mrb[0].mxu0
  %v604 = vadd.f32 %v487, %v603
  %v605 = vpop.f32.mrb[0].mxu0
  %v606 = vpop.f32.mrb[0].mxu0
  %v607 = vadd.f32 %v487, %v606
  %v608 = vpop.f32.mrb[0].mxu0
  %609 = vmatprep.mubr.bf16.mxu0 0
  %610 = vmatmul.mubr.bf16.gmra.mrb[0].mxu0 %v455
  %v611 = vpop.f32.mrb[0].mxu0
  %v612 = vadd.f32 %v487, %v611
  %v613 = vpop.f32.mrb[0].mxu0
  %v614 = vpop.f32.mrb[0].mxu0
  %v615 = vadd.f32 %v487, %v614
  %v616 = vpop.f32.mrb[0].mxu0
  %617 = vmatprep.mubr.bf16.mxu0 0
  %618 = vmatmul.mubr.bf16.gmra.mrb[0].mxu0 %v456
  %v619 = vpop.f32.mrb[0].mxu0
  %v620 = vadd.f32 %v487, %v619
  %v621 = vpop.f32.mrb[0].mxu0
  %v622 = vpop.f32.mrb[0].mxu0
  %v623 = vadd.f32 %v487, %v622
  %v624 = vpop.f32.mrb[0].mxu0
  %625 = vmatprep.mubr.bf16.mxu0 0
  %626 = vmatmul.mubr.bf16.gmra.mrb[0].mxu0 %v457
  %v627 = vpop.f32.mrb[0].mxu0
  %v628 = vadd.f32 %v487, %v627
  %v629 = vpop.f32.mrb[0].mxu0
  %v630 = vpop.f32.mrb[0].mxu0
  %v631 = vadd.f32 %v487, %v630
  %v632 = vpop.f32.mrb[0].mxu0
  %633 = vmatprep.mubr.bf16.mxu0 0
  %634 = vmatmul.mubr.bf16.gmra.mrb[0].mxu0 %v458
  %v635 = vpop.f32.mrb[0].mxu0
  %v636 = vadd.f32 %v487, %v635
  %v637 = vpop.f32.mrb[0].mxu0
  %v638 = vpop.f32.mrb[0].mxu0
  %v639 = vadd.f32 %v487, %v638
  %v640 = vpop.f32.mrb[0].mxu0
  %641 = vmatprep.mubr.bf16.mxu0 0
  %642 = vmatmul.mubr.bf16.gmra.mrb[0].mxu0 %v459
  %v643 = vpop.f32.mrb[0].mxu0
  %v644 = vadd.f32 %v487, %v643
  %v645 = vpop.f32.mrb[0].mxu0
  %v646 = vpop.f32.mrb[0].mxu0
  %v647 = vadd.f32 %v487, %v646
  %v648 = vpop.f32.mrb[0].mxu0
  %649 = vmatprep.mubr.bf16.mxu0 0
  %650 = vmatmul.mubr.bf16.gmra.mrb[0].mxu0 %v460
  %v651 = vpop.f32.mrb[0].mxu0
  %v652 = vadd.f32 %v487, %v651
  %v653 = vpop.f32.mrb[0].mxu0
  %v654 = vpop.f32.mrb[0].mxu0
  %v655 = vadd.f32 %v487, %v654
  %v656 = vpop.f32.mrb[0].mxu0
  %657 = vmatprep.mubr.bf16.mxu0 0
  %658 = vmatmul.mubr.bf16.gmra.mrb[0].mxu0 %v461
  %v659 = vpop.f32.mrb[0].mxu0
  %v660 = vadd.f32 %v487, %v659
  %v661 = vpop.f32.mrb[0].mxu0
  %v662 = vpop.f32.mrb[0].mxu0
  %v663 = vadd.f32 %v487, %v662
  %v664 = vpop.f32.mrb[0].mxu0
  %665 = vmatprep.mubr.bf16.mxu0 0
  %666 = vmatmul.mubr.bf16.gmra.mrb[0].mxu0 %v462
  %v667 = vpop.f32.mrb[0].mxu0
  %v668 = vadd.f32 %v487, %v667
  %v669 = vpop.f32.mrb[0].mxu0
  %v670 = vpop.f32.mrb[0].mxu0
  %v671 = vadd.f32 %v487, %v670
  %v672 = vpop.f32.mrb[0].mxu0
  %673 = vmatprep.mubr.bf16.mxu0 0
  %674 = vmatmul.mubr.bf16.gmra.mrb[0].mxu0 %v463
  %v675 = vpop.f32.mrb[0].mxu0
  %v676 = vadd.f32 %v487, %v675
  %v677 = vpop.f32.mrb[0].mxu0
  %v678 = vpop.f32.mrb[0].mxu0
  %v679 = vadd.f32 %v487, %v678
  %v680 = vpop.f32.mrb[0].mxu0
  %681 = vmatprep.mubr.bf16.mxu0 0
  %682 = vmatmul.mubr.bf16.gmra.mrb[0].mxu0 %v464
  %v683 = vpop.f32.mrb[0].mxu0
  %v684 = vadd.f32 %v487, %v683
  %v685 = vpop.f32.mrb[0].mxu0
  %v686 = vpop.f32.mrb[0].mxu0
  %v687 = vadd.f32 %v487, %v686
  %v688 = vpop.f32.mrb[0].mxu0
  %689 = vmatprep.mubr.bf16.mxu0 0
  %690 = vmatmul.mubr.bf16.gmra.mrb[0].mxu0 %v465
  %v691 = vpop.f32.mrb[0].mxu0
  %v692 = vadd.f32 %v487, %v691
  %v693 = vpop.f32.mrb[0].mxu0
  %v694 = vpop.f32.mrb[0].mxu0
  %v695 = vadd.f32 %v487, %v694
  %v696 = vpop.f32.mrb[0].mxu0
  %697 = vdwg.mxu0
  %698 = vst [vmem:[%s7] sm:$0xff] %v572
  %699 = vst [vmem:[%s7 + $0x8] sm:$0xff] %v575
  %700 = vst [vmem:[%s7 + $0x10] sm:$0xff] %v580
  %701 = vst [vmem:[%s7 + $0x18] sm:$0xff] %v583
  %702 = vst [vmem:[%s7 + $0x20] sm:$0xff] %v588
  %703 = vst [vmem:[%s7 + $0x28] sm:$0xff] %v591
  %704 = vst [vmem:[%s7 + $0x30] sm:$0xff] %v596
  %705 = vst [vmem:[%s7 + $0x38] sm:$0xff] %v599
  %706 = vst [vmem:[%s7 + $0x40] sm:$0xff] %v604
  %707 = vst [vmem:[%s7 + $0x48] sm:$0xff] %v607
  %708 = vst [vmem:[%s7 + $0x50] sm:$0xff] %v612
  %709 = vst [vmem:[%s7 + $0x58] sm:$0xff] %v615
  %710 = vst [vmem:[%s7 + $0x60] sm:$0xff] %v620
  %711 = vst [vmem:[%s7 + $0x68] sm:$0xff] %v623
  %712 = vst [vmem:[%s7 + $0x70] sm:$0xff] %v628
  %713 = vst [vmem:[%s7 + $0x78] sm:$0xff] %v631
  %714 = vst [vmem:[%s7 + $0x80] sm:$0xff] %v636
  %715 = vst [vmem:[%s7 + $0x88] sm:$0xff] %v639
  %716 = vst [vmem:[%s7 + $0x90] sm:$0xff] %v644
  %717 = vst [vmem:[%s7 + $0x98] sm:$0xff] %v647
  %718 = vst [vmem:[%s7 + $0xa0] sm:$0xff] %v652
  %719 = vst [vmem:[%s7 + $0xa8] sm:$0xff] %v655
  %720 = vst [vmem:[%s7 + $0xb0] sm:$0xff] %v660
  %721 = vst [vmem:[%s7 + $0xb8] sm:$0xff] %v663
  %722 = vst [vmem:[%s7 + $0xc0] sm:$0xff] %v668
  %723 = vst [vmem:[%s7 + $0xc8] sm:$0xff] %v671
  %724 = vst [vmem:[%s7 + $0xd0] sm:$0xff] %v676
  %725 = vst [vmem:[%s7 + $0xd8] sm:$0xff] %v679
  %726 = vst [vmem:[%s7 + $0xe0] sm:$0xff] %v684
  %727 = vst [vmem:[%s7 + $0xe8] sm:$0xff] %v687
  %728 = vst [vmem:[%s7 + $0xf0] sm:$0xff] %v692
  %729 = vst [vmem:[%s7 + $0xf8] sm:$0xff] %v695
  // Predicated region
  $region30: #{_es_mlp_forward_padded.1} parent=0 // pred_check
    _
  $region31: #{_es_mlp_forward_padded.1} parent=0 // pred_check_branch
    %731 = sbr.rel (0) target = $region33
  $region32: #{_es_mlp_forward_padded.1} parent=0 // pred_region
    _
  $region33: #{_es_mlp_forward_padded.1} parent=0 // pred_fallthru
    _
  // Predicated region
  $region34: #{_es_mlp_forward_padded.1} parent=0 // pred_check
    _
  $region35: #{_es_mlp_forward_padded.1} parent=0 // pred_check_branch
    %733 = sbr.rel (0) target = $region37
  $region36: #{_es_mlp_forward_padded.1} parent=0 // pred_region
    _
  $region37: #{_es_mlp_forward_padded.1} parent=0 // pred_fallthru
    _

</llo_original>
